<compile_context>
chip_gen: v5e
topology: v5e:2x2
jax: 0.10.0
libtpu: 0.0.40
codegen_flags: <defaults>
</compile_context>

<pallas_src>
import functools

import jax
import jax.numpy as jnp
from jax.experimental import pallas as pl
from jax.experimental.pallas import tpu as pltpu

SMOOTH = 1e-6
LANES = 128
SUBLANES = 8


def _sublane_multiple(dtype):
    # Native sublane packing: f32 -> 8, bf16/f16 -> 16, int8/fp8 -> 32.
    return max(SUBLANES, 32 // jnp.dtype(dtype).itemsize)


def _tpu_defaults():
    """(block_rows, num_cores, vmem_limit_bytes) tuned per TPU generation."""
    try:
        kind = jax.devices()[0].device_kind.lower()
    except Exception:
        kind = ""
    if "v7" in kind or "7x" in kind:
        # 16384 x 128 f32 = 8 MiB per input block; 2 inputs x 2 pipeline bufs
        # = 32 MiB, so raise the scoped-VMEM limit (64 MiB physical per TC,
        # leave headroom for compiler scratch). Two TensorCores per chip.
        return 16384, 2, 40 << 20
    if "v6" in kind:
        # 4 MiB per input block; 16 MiB resident fits the 32 MiB default
        # scoped VMEM with no override. Single TensorCore.
        return 8192, 1, None
    # v5e (16 MiB default scoped VMEM) and anything unknown: conservative.
    return 4096, 1, None


def _dice_kernel(x_ref, t_ref, xt_ref, s_ref, *, rows, block_rows,
                 blocks_per_core, may_mask):
    core = pl.program_id(0)
    step = pl.program_id(1)

    # Per-core init: step 0 of *this core's* sub-range zeroes its own
    # resident output partials (works both sequentially and core-sharded).
    @pl.when(step == 0)
    def _():
        xt_ref[...] = jnp.zeros_like(xt_ref)
        s_ref[...] = jnp.zeros_like(s_ref)

    x = x_ref[...].astype(jnp.float32)
    t = t_ref[...].astype(jnp.float32)

    def accumulate(xv, tv):
        xt = xv * tv
        s = xv + tv
        if block_rows % SUBLANES == 0:
            # vreg-shaped partials: reduction over the leading (non-layout)
            # axis is a chain of pure VPU vreg adds, hidden under the DMA.
            xt_ref[...] += jnp.sum(xt.reshape(-1, SUBLANES, LANES), axis=0)[None]
            s_ref[...] += jnp.sum(s.reshape(-1, SUBLANES, LANES), axis=0)[None]
        else:
            # Only reachable when the whole input fits in one block whose row
            # count is not a multiple of 8 (tiny inputs): fold into row 0.
            row0 = jax.lax.broadcasted_iota(jnp.int32, (SUBLANES, LANES), 0) == 0
            xt_ref[...] += jnp.where(
                row0, jnp.sum(xt, axis=0, keepdims=True), 0.0)[None]
            s_ref[...] += jnp.where(
                row0, jnp.sum(s, axis=0, keepdims=True), 0.0)[None]

    block_start = (core * blocks_per_core + step) * block_rows

    if not may_mask:
        # Grid tiles the row range exactly: never emit the masked path.
        accumulate(x, t)
    else:
        is_full = block_start + block_rows <= rows

        @pl.when(is_full)
        def _():
            accumulate(x, t)

        @pl.when(jnp.logical_not(is_full))
        def _():
            # Ragged tail (or a clamped phantom block): zero invalid rows
            # BEFORE x*t / x+t so unspecified overhang (even NaN/Inf) cannot
            # leak into the sums. Runs on at most one step per core.
            row_ids = block_start + jax.lax.broadcasted_iota(
                jnp.int32, x.shape, 0)
            valid = row_ids < rows
            accumulate(jnp.where(valid, x, 0.0), jnp.where(valid, t, 0.0))


def dice_loss(inputs, targets, smooth=SMOOTH, block_rows=None, num_cores=None,
              vmem_limit_bytes=None):
    """inputs, targets: (N, 1, H, W) arrays (f32 or bf16). Returns f32 scalar."""
    x = inputs.reshape(-1)
    t = targets.reshape(-1)
    total = x.shape[0]
    if total == 0:
        # Empty input: dice = smooth / smooth = 1 -> loss = 0.
        return jnp.zeros((), jnp.float32)

    d_rows, d_cores, d_vmem = _tpu_defaults()
    if block_rows is None:
        block_rows = d_rows
    if num_cores is None:
        num_cores = d_cores
    if vmem_limit_bytes is None:
        vmem_limit_bytes = d_vmem

    # Pad only to the 128-lane boundary (at most 127 zeros, contribute nothing
    # to the sums). The common case needs no copy at all.
    pad = (-total) % LANES
    if pad:
        x = jnp.pad(x, (0, pad))
        t = jnp.pad(t, (0, pad))
    rows = (total + pad) // LANES

    x2 = x.reshape(rows, LANES)
    t2 = t.reshape(rows, LANES)

    # Sublane alignment depends on the narrowest streamed dtype (bf16 -> 16).
    sub = max(_sublane_multiple(x2.dtype), _sublane_multiple(t2.dtype))
    if rows <= block_rows:
        block_rows = rows                               # single full-array block
    else:
        block_rows = max(sub, (block_rows // sub) * sub)

    total_blocks = pl.cdiv(rows, block_rows)
    num_cores = max(1, min(int(num_cores), total_blocks))
    blocks_per_core = pl.cdiv(total_blocks, num_cores)
    max_block = total_blocks - 1
    may_mask = (num_cores * blocks_per_core * block_rows) != rows

    kernel = functools.partial(
        _dice_kernel, rows=rows, block_rows=block_rows,
        blocks_per_core=blocks_per_core, may_mask=may_mask)

    # Clamp so a phantom block (grid over-coverage) never DMAs out of bounds;
    # its rows are masked to zero in-kernel.
    in_map = lambda c, i: (jnp.minimum(c * blocks_per_core + i, max_block), 0)
    out_map = lambda c, i: (c, 0, 0)

    xt_part, s_part = pl.pallas_call(
        kernel,
        out_shape=(jax.ShapeDtypeStruct((num_cores, SUBLANES, LANES), jnp.float32),
                   jax.ShapeDtypeStruct((num_cores, SUBLANES, LANES), jnp.float32)),
        grid_spec=pltpu.PrefetchScalarGridSpec(
            num_scalar_prefetch=0,
            grid=(num_cores, blocks_per_core),
            in_specs=[
                pl.BlockSpec((block_rows, LANES), in_map),
                pl.BlockSpec((block_rows, LANES), in_map),
            ],
            out_specs=[
                pl.BlockSpec((1, SUBLANES, LANES), out_map),
                pl.BlockSpec((1, SUBLANES, LANES), out_map),
            ],
        ),
        compiler_params=pltpu.CompilerParams(
            dimension_semantics=("parallel", "arbitrary"),
            vmem_limit_bytes=vmem_limit_bytes,
        ),
    )(x2, t2)

    # Tiny epilogue in XLA: reduce the (num_cores, 8, 128) partials + formula.
    intersection = jnp.sum(xt_part)
    total_sum = jnp.sum(s_part)
    smooth = jnp.float32(smooth)
    dice = (2.0 * intersection + smooth) / (total_sum + smooth)
    return (1.0 - dice).astype(jnp.float32)


def dice_loss_ref(inputs, targets, smooth=SMOOTH):
    x = inputs.reshape(-1).astype(jnp.float32)
    t = targets.reshape(-1).astype(jnp.float32)
    intersection = jnp.sum(x * t)
    dice = (2.0 * intersection + smooth) / (jnp.sum(x) + jnp.sum(t) + smooth)
    return 1.0 - dice


if __name__ == "__main__":
    key = jax.random.PRNGKey(0)
    k1, k2 = jax.random.split(key)

    # 1) Small NCHW case (2,1,16,16): 512 elems -> 4 rows -> single tiny block.
    N, C, H, W = 2, 1, 16, 16
    inputs = jax.nn.sigmoid(jax.random.normal(k1, (N, C, H, W), jnp.float32))
    targets = (jax.random.uniform(k2, (N, C, H, W)) > 0.5).astype(jnp.float32)
    loss = jax.block_until_ready(dice_loss(inputs, targets))
    ref = dice_loss_ref(inputs, targets)
    assert jnp.allclose(loss, ref, atol=1e-5, rtol=1e-5), (loss, ref)

    # 2) Multi-block + ragged tail: 1152 elems -> 9 rows, block_rows=8 ->
    #    2 blocks, the second has 1 valid row and 7 masked rows.
    k3, k4 = jax.random.split(k2)
    inp2 = jax.nn.sigmoid(jax.random.normal(k3, (2, 1, 24, 24), jnp.float32))
    tgt2 = (jax.random.uniform(k4, (2, 1, 24, 24)) > 0.5).astype(jnp.float32)
    loss2 = jax.block_until_ready(dice_loss(inp2, tgt2, block_rows=8, num_cores=1))
    ref2 = dice_loss_ref(inp2, tgt2)
    assert jnp.allclose(loss2, ref2, atol=1e-5, rtol=1e-5), (loss2, ref2)

    # 3) Two-core split path (+ clamped phantom block): 2304 elems -> 18 rows,
    #    block_rows=8 -> 3 real blocks over a (2, 2) grid; core 1's second
    #    block is clamped and fully masked. Correct on 1-TC chips too (the
    #    parallel axis just runs sequentially).
    k5, k6 = jax.random.split(k4)
    inp3 = jax.nn.sigmoid(jax.random.normal(k5, (1, 1, 48, 48), jnp.float32))
    tgt3 = (jax.random.uniform(k6, (1, 1, 48, 48)) > 0.5).astype(jnp.float32)
    loss3 = jax.block_until_ready(dice_loss(inp3, tgt3, block_rows=8, num_cores=2))
    ref3 = dice_loss_ref(inp3, tgt3)
    assert jnp.allclose(loss3, ref3, atol=1e-5, rtol=1e-5), (loss3, ref3)

    # 4) bf16 passthrough (halves HBM traffic for the prediction stream):
    #    4608 elems -> 36 rows, block_rows rounded to the bf16 sublane
    #    multiple (16) -> 3 blocks with a masked tail.
    k7, k8 = jax.random.split(k6)
    inp4 = jax.nn.sigmoid(jax.random.normal(k7, (2, 1, 48, 48), jnp.float32)
                          ).astype(jnp.bfloat16)
    tgt4 = (jax.random.uniform(k8, (2, 1, 48, 48)) > 0.5).astype(jnp.float32)
    loss4 = jax.block_until_ready(dice_loss(inp4, tgt4, block_rows=16, num_cores=1))
    ref4 = dice_loss_ref(inp4, tgt4)
    assert jnp.allclose(loss4, ref4, atol=1e-5, rtol=1e-5), (loss4, ref4)

    print("KERNEL_OK")
</pallas_src>

<mosaic_0001>
module attributes {stable_mosaic.version = 11 : i64} {
  func.func @_dice_kernel(%arg0: i32, %arg1: i32, %arg2: memref<4x128xf32, #tpu.memory_space<vmem>>, %arg3: memref<4x128xf32, #tpu.memory_space<vmem>>, %arg4: memref<1x8x128xf32, #tpu.memory_space<vmem>>, %arg5: memref<1x8x128xf32, #tpu.memory_space<vmem>>) attributes {dimension_semantics = [#tpu.dimension_semantics<parallel>, #tpu.dimension_semantics<arbitrary>], iteration_bounds = array<i64: 1, 1>, scalar_prefetch = 0 : i64, scratch_operands = 0 : i64, tpu.core_type = #tpu.core_type<tc>, window_params = [{transform_indices = @transform_0, window_bounds = array<i64: 4, 128>}, {transform_indices = @transform_1, window_bounds = array<i64: 4, 128>}, {transform_indices = @transform_2, window_bounds = array<i64: 1, 8, 128>}, {transform_indices = @transform_3, window_bounds = array<i64: 1, 8, 128>}]} {
    %c0_i32 = arith.constant 0 : i32
    %0 = arith.cmpi eq, %arg1, %c0_i32 : i32
    %1 = arith.extui %0 : i1 to i32
    %c0_i32_0 = arith.constant 0 : i32
    %2 = arith.cmpi ne, %1, %c0_i32_0 : i32
    scf.if %2 {
      %cst_20 = arith.constant 0.000000e+00 : f32
      %30 = vector.broadcast %cst_20 : f32 to vector<1x8x128xf32>
      %c0_21 = arith.constant 0 : index
      %c0_22 = arith.constant 0 : index
      %c0_23 = arith.constant 0 : index
      %31 = vector.load %arg4[%c0_21, %c0_22, %c0_23] : memref<1x8x128xf32, #tpu.memory_space<vmem>>, vector<1x8x128xf32>
      tpu.vector_store %arg4[%c0_21, %c0_22, %c0_23], %30 {strides = array<i32>} : memref<1x8x128xf32, #tpu.memory_space<vmem>>, vector<1x8x128xf32>,
      %cst_24 = arith.constant 0.000000e+00 : f32
      %32 = vector.broadcast %cst_24 : f32 to vector<1x8x128xf32>
      %c0_25 = arith.constant 0 : index
      %c0_26 = arith.constant 0 : index
      %c0_27 = arith.constant 0 : index
      %33 = vector.load %arg5[%c0_25, %c0_26, %c0_27] : memref<1x8x128xf32, #tpu.memory_space<vmem>>, vector<1x8x128xf32>
      tpu.vector_store %arg5[%c0_25, %c0_26, %c0_27], %32 {strides = array<i32>} : memref<1x8x128xf32, #tpu.memory_space<vmem>>, vector<1x8x128xf32>,
    } else {
    }
    %c0 = arith.constant 0 : index
    %c0_1 = arith.constant 0 : index
    %3 = vector.load %arg2[%c0, %c0_1] : memref<4x128xf32, #tpu.memory_space<vmem>>, vector<4x128xf32>
    %c0_2 = arith.constant 0 : index
    %c0_3 = arith.constant 0 : index
    %4 = vector.load %arg3[%c0_2, %c0_3] : memref<4x128xf32, #tpu.memory_space<vmem>>, vector<4x128xf32>
    %5 = arith.mulf %3, %4 : vector<4x128xf32>
    %6 = arith.addf %3, %4 : vector<4x128xf32>
    %7 = tpu.iota {dimensions = array<i32: 0>} : vector<8x128xi32>
    %c0_i32_4 = arith.constant 0 : i32
    %8 = vector.broadcast %c0_i32_4 : i32 to vector<8x128xi32>
    %9 = arith.cmpi eq, %7, %8 : vector<8x128xi32>
    %c0_5 = arith.constant 0 : index
    %c0_6 = arith.constant 0 : index
    %c0_7 = arith.constant 0 : index
    %10 = vector.load %arg4[%c0_5, %c0_6, %c0_7] : memref<1x8x128xf32, #tpu.memory_space<vmem>>, vector<1x8x128xf32>
    %cst = arith.constant dense<0.000000e+00> : vector<128xf32>
    %11 = vector.multi_reduction <add>, %5, %cst [0] : vector<4x128xf32> to vector<128xf32>
    %12 = vector.shape_cast %11 : vector<128xf32> to vector<1x128xf32>
    %cst_8 = arith.constant 0.000000e+00 : f32
    %13 = vector.shape_cast %12 : vector<1x128xf32> to vector<1x128xf32>
    %14 = vector.broadcast %13 : vector<1x128xf32> to vector<8x128xf32>
    %15 = vector.broadcast %cst_8 : f32 to vector<8x128xf32>
    %16 = arith.select %9, %14, %15 : vector<8x128xi1>, vector<8x128xf32>
    %17 = vector.shape_cast %16 : vector<8x128xf32> to vector<1x8x128xf32>
    %18 = arith.addf %10, %17 : vector<1x8x128xf32>
    %c0_9 = arith.constant 0 : index
    %c0_10 = arith.constant 0 : index
    %c0_11 = arith.constant 0 : index
    %19 = vector.load %arg4[%c0_9, %c0_10, %c0_11] : memref<1x8x128xf32, #tpu.memory_space<vmem>>, vector<1x8x128xf32>
    tpu.vector_store %arg4[%c0_9, %c0_10, %c0_11], %18 {strides = array<i32>} : memref<1x8x128xf32, #tpu.memory_space<vmem>>, vector<1x8x128xf32>,
    %c0_12 = arith.constant 0 : index
    %c0_13 = arith.constant 0 : index
    %c0_14 = arith.constant 0 : index
    %20 = vector.load %arg5[%c0_12, %c0_13, %c0_14] : memref<1x8x128xf32, #tpu.memory_space<vmem>>, vector<1x8x128xf32>
    %cst_15 = arith.constant dense<0.000000e+00> : vector<128xf32>
    %21 = vector.multi_reduction <add>, %6, %cst_15 [0] : vector<4x128xf32> to vector<128xf32>
    %22 = vector.shape_cast %21 : vector<128xf32> to vector<1x128xf32>
    %cst_16 = arith.constant 0.000000e+00 : f32
    %23 = vector.shape_cast %22 : vector<1x128xf32> to vector<1x128xf32>
    %24 = vector.broadcast %23 : vector<1x128xf32> to vector<8x128xf32>
    %25 = vector.broadcast %cst_16 : f32 to vector<8x128xf32>
    %26 = arith.select %9, %24, %25 : vector<8x128xi1>, vector<8x128xf32>
    %27 = vector.shape_cast %26 : vector<8x128xf32> to vector<1x8x128xf32>
    %28 = arith.addf %20, %27 : vector<1x8x128xf32>
    %c0_17 = arith.constant 0 : index
    %c0_18 = arith.constant 0 : index
    %c0_19 = arith.constant 0 : index
    %29 = vector.load %arg5[%c0_17, %c0_18, %c0_19] : memref<1x8x128xf32, #tpu.memory_space<vmem>>, vector<1x8x128xf32>
    tpu.vector_store %arg5[%c0_17, %c0_18, %c0_19], %28 {strides = array<i32>} : memref<1x8x128xf32, #tpu.memory_space<vmem>>, vector<1x8x128xf32>,
    return
  }
  func.func @transform_0(%arg0: i32, %arg1: i32) -> (i32, i32) {
    %c1_i32 = arith.constant 1 : i32
    %0 = arith.muli %arg0, %c1_i32 : i32
    %1 = arith.addi %0, %arg1 : i32
    %c0_i32 = arith.constant 0 : i32
    %2 = arith.minsi %1, %c0_i32 : i32
    %c0_i32_0 = arith.constant 0 : i32
    %c0_i32_1 = arith.constant 0 : i32
    return %2, %c0_i32_0 : i32, i32
  }
  func.func @transform_1(%arg0: i32, %arg1: i32) -> (i32, i32) {
    %c1_i32 = arith.constant 1 : i32
    %0 = arith.muli %arg0, %c1_i32 : i32
    %1 = arith.addi %0, %arg1 : i32
    %c0_i32 = arith.constant 0 : i32
    %2 = arith.minsi %1, %c0_i32 : i32
    %c0_i32_0 = arith.constant 0 : i32
    %c0_i32_1 = arith.constant 0 : i32
    return %2, %c0_i32_0 : i32, i32
  }
  func.func @transform_2(%arg0: i32, %arg1: i32) -> (i32, i32, i32) {
    %c0_i32 = arith.constant 0 : i32
    %c0_i32_0 = arith.constant 0 : i32
    %c0_i32_1 = arith.constant 0 : i32
    return %arg0, %c0_i32, %c0_i32_0 : i32, i32, i32
  }
  func.func @transform_3(%arg0: i32, %arg1: i32) -> (i32, i32, i32) {
    %c0_i32 = arith.constant 0 : i32
    %c0_i32_0 = arith.constant 0 : i32
    %c0_i32_1 = arith.constant 0 : i32
    return %arg0, %c0_i32, %c0_i32_0 : i32, i32, i32
  }
}

</mosaic_0001>

<llo_original>
// kernel: tpu_custom_call.1
$region0: #{tpu_custom_call.1}
  #allocation0 [shape = 'u32[]', space=smem, size = 0x4, offset = 0x4, fixed_abs, tag = 'smem constant byte address 0x4 - core index']
  #allocation1 [shape = 'u32[72,128]{1,0:T(1,128)}', space=vmem, size = 0x9000, scoped, tag = 'internal scratch']
  %s0 = inlined_call_operand.hbm [shape: f32[4,128], index: 0, kind: input, shape index: {}]
  %s1 = inlined_call_operand.hbm [shape: f32[4,128], index: 1, kind: input, shape index: {}]
  %s2 = inlined_call_operand.hbm [shape: f32[1,8,128], index: 2, kind: output, shape index: {0}]
  %s3 = inlined_call_operand.hbm [shape: f32[1,8,128], index: 3, kind: output, shape index: {1}]
  %4 = xla_tuple %s2, %s3
  %s5 = sld [smem:[#allocation0]]
  $region38: #{tpu_custom_call.1} parent=0
    _
  %s7 = ssub.s32 1, %s5
  %s8 = scalar_select 0, %s7, %s5
  $region1: #{tpu_custom_call.1} parent=0
    #allocation2 [shape = 'u8[2048]{0}', space=vmem, size = 0x800, scoped, tag = 'input window, operand 0, single buffered']
    #allocation3 [shape = 's32[1]{0}', space=sflag, size = 0x4, scoped, tag = 'scoped memory for tpu_custom_call.1']
    #allocation4 [shape = 's32[1]{0}', space=sflag, size = 0x4, scoped, tag = 'scoped memory for tpu_custom_call.1']
    #allocation5 [shape = 'u8[2048]{0}', space=vmem, size = 0x800, scoped, tag = 'input window, operand 1, single buffered']
    #allocation6 [shape = 's32[1]{0}', space=sflag, size = 0x4, scoped, tag = 'scoped memory for tpu_custom_call.1']
    #allocation7 [shape = 'u8[4096]{0}', space=vmem, size = 0x1000, scoped, tag = 'output window, operand 0, single buffered']
    #allocation8 [shape = 'u8[4096]{0}', space=vmem, size = 0x1000, scoped, tag = 'output window, operand 1, single buffered']
    #allocation9 [shape = 's32[1]{0}', space=sflag, size = 0x4, scoped, tag = 'scoped memory for tpu_custom_call.1']
    %9 = vsyncpa [#allocation3], 0
    %10 = vsyncpa [#allocation6], 0
    %11 = vsyncpa [#allocation4], 0
    %12 = vsyncpa [#allocation9], 0
    // Predicated region
    $region2: #{tpu_custom_call.1} parent=1 // pred_check
      _
    $region3: #{tpu_custom_call.1} parent=1 // pred_check_branch
      %14 = sbr.rel (0) target = $region5
    $region4: #{tpu_custom_call.1} parent=1 // pred_region
      %s15 = sadd.s32 0, 0
      %p16 = scmp.lt.s32.totalorder %s15, 0
      %s17 = scalar_select %p16, %s15, 0
      %19 = vsyncadd [#allocation3], 0
      %s20 = smul.addr %s17, 4
      %s21 = scalar_lea.hbm %s0, %s20
      %s23 = sshll.u32 %s21, 4
      %s24 = int_to_ptr.hbm [resolvable:$true] %s23
      %s25 = sshll.u32 [#allocation2], 4
      %s26 = int_to_ptr.vmem [resolvable:$true] %s25
      %28 = dma.hbm_to_vmem [thread:$0]  %s24, 64, %s26, [#allocation3]
    $region5: #{tpu_custom_call.1} parent=1 // pred_fallthru
      _
    // Predicated region
    $region6: #{tpu_custom_call.1} parent=1 // pred_check
      _
    $region7: #{tpu_custom_call.1} parent=1 // pred_check_branch
      %30 = sbr.rel (0) target = $region9
    $region8: #{tpu_custom_call.1} parent=1 // pred_region
      %s31 = sadd.s32 0, 0
      %p32 = scmp.lt.s32.totalorder %s31, 0
      %s33 = scalar_select %p32, %s31, 0
      %35 = vsyncadd [#allocation6], 0
      %s36 = smul.addr %s33, 4
      %s37 = scalar_lea.hbm %s1, %s36
      %s39 = sshll.u32 %s37, 4
      %s40 = int_to_ptr.hbm [resolvable:$true] %s39
      %s41 = sshll.u32 [#allocation5], 4
      %s42 = int_to_ptr.vmem [resolvable:$true] %s41
      %44 = dma.hbm_to_vmem [thread:$0]  %s40, 64, %s42, [#allocation6]
    $region9: #{tpu_custom_call.1} parent=1 // pred_fallthru
      _
    // Predicated region
    $region10: #{tpu_custom_call.1} parent=1 // pred_check
      _
    $region11: #{tpu_custom_call.1} parent=1 // pred_check_branch
      %46 = sbr.rel (0) target = $region13
    $region12: #{tpu_custom_call.1} parent=1 // pred_region
      %48 = dma.done [#allocation3], 64
    $region13: #{tpu_custom_call.1} parent=1 // pred_fallthru
      _
    // Predicated region
    $region14: #{tpu_custom_call.1} parent=1 // pred_check
      _
    $region15: #{tpu_custom_call.1} parent=1 // pred_check_branch
      %50 = sbr.rel (0) target = $region17
    $region16: #{tpu_custom_call.1} parent=1 // pred_region
      %52 = dma.done [#allocation6], 64
    $region17: #{tpu_custom_call.1} parent=1 // pred_fallthru
      _
    %s53 = sadd.s32 0, 0
    %p54 = scmp.lt.s32.totalorder %s53, 0
    %s55 = scalar_select %p54, %s53, 0
    %s56 = sadd.s32 0, 0
    %p57 = scmp.lt.s32.totalorder %s56, 0
    %s58 = scalar_select %p57, %s56, 0
    %p59 = scmp.eq.s32.totalorder 0, 0
    // Predicated region
    $region18: #{tpu_custom_call.1} parent=1 // pred_check
      %p60 = pneg %p59
    $region19: #{tpu_custom_call.1} parent=1 // pred_check_branch
      %62 = sbr.rel (%p60) target = $region21
    $region20: #{tpu_custom_call.1} parent=1 // pred_region
      %63 = vst [vmem:[#allocation7] sm:$0xff] 0.0
      %64 = vst [vmem:[#allocation8] sm:$0xff] 0.0
    $region21: #{tpu_custom_call.1} parent=1 // pred_fallthru
      _
    %v65 = vld [vmem:[#allocation2] sm:$0xf]
    %v66 = vld [vmem:[#allocation5] sm:$0xf]
    %v67 = vmul.f32 %v65, %v66
    %v68 = vadd.f32 %v65, %v66
    %v69 = vlaneseq
    %v70 = vshrl.u32 %v69, 7
    %vm71 = vcmp.eq.s32.totalorder %v70, 0
    %v72 = vld [vmem:[#allocation7] sm:$0xff]
    %vm73 = vcmask 1043456
    %v74 = vsel %vm73, %v67, 0.0
    %v75 = vrot.slane %v74, 4
    %v76 = vadd.f32 %v74, %v75
    %v77 = vrot.slane %v76, 2
    %v78 = vadd.f32 %v76, %v77
    %v79 = vrot.slane %v78, 1
    %v80 = vadd.f32 %v78, %v79
    %v81 = vsel %vm71, %v80, 0.0
    %v82 = vadd.f32 %v72, %v81
    %83 = vst [vmem:[#allocation7] sm:$0xff] %v82
    %v84 = vld [vmem:[#allocation8] sm:$0xff]
    %v85 = vsel %vm73, %v68, 0.0
    %v86 = vrot.slane %v85, 4
    %v87 = vadd.f32 %v85, %v86
    %v88 = vrot.slane %v87, 2
    %v89 = vadd.f32 %v87, %v88
    %v90 = vrot.slane %v89, 1
    %v91 = vadd.f32 %v89, %v90
    %v92 = vsel %vm71, %v91, 0.0
    %v93 = vadd.f32 %v84, %v92
    %94 = vst [vmem:[#allocation8] sm:$0xff] %v93
    // Predicated region
    $region22: #{tpu_custom_call.1} parent=1 // pred_check
      _
    $region23: #{tpu_custom_call.1} parent=1 // pred_check_branch
      %96 = sbr.rel (0) target = $region25
    $region24: #{tpu_custom_call.1} parent=1 // pred_region
      %98 = vsyncadd [#allocation4], 0
      %s100 = sshll.u32 [#allocation7], 4
      %s101 = int_to_ptr.vmem [resolvable:$true] %s100
      %s102 = sshll.u32 %s2, 4
      %s103 = int_to_ptr.hbm [resolvable:$true] %s102
      %105 = dma.vmem_to_hbm [thread:$0]  %s101, 128, %s103, [#allocation4]
    $region25: #{tpu_custom_call.1} parent=1 // pred_fallthru
      _
    // Predicated region
    $region26: #{tpu_custom_call.1} parent=1 // pred_check
      _
    $region27: #{tpu_custom_call.1} parent=1 // pred_check_branch
      %107 = sbr.rel (0) target = $region29
    $region28: #{tpu_custom_call.1} parent=1 // pred_region
      %109 = vsyncadd [#allocation9], 0
      %s111 = sshll.u32 [#allocation8], 4
      %s112 = int_to_ptr.vmem [resolvable:$true] %s111
      %s113 = sshll.u32 %s3, 4
      %s114 = int_to_ptr.hbm [resolvable:$true] %s113
      %116 = dma.vmem_to_hbm [thread:$0]  %s112, 128, %s114, [#allocation9]
    $region29: #{tpu_custom_call.1} parent=1 // pred_fallthru
      _
    // Predicated region
    $region30: #{tpu_custom_call.1} parent=1 // pred_check
      _
    $region31: #{tpu_custom_call.1} parent=1 // pred_check_branch
      %118 = sbr.rel (0) target = $region33
    $region32: #{tpu_custom_call.1} parent=1 // pred_region
      %120 = dma.done [#allocation4], 128
    $region33: #{tpu_custom_call.1} parent=1 // pred_fallthru
      _
    // Predicated region
    $region34: #{tpu_custom_call.1} parent=1 // pred_check
      _
    $region35: #{tpu_custom_call.1} parent=1 // pred_check_branch
      %122 = sbr.rel (0) target = $region37
    $region36: #{tpu_custom_call.1} parent=1 // pred_region
      %124 = dma.done [#allocation9], 128
    $region37: #{tpu_custom_call.1} parent=1 // pred_fallthru
      _
    %125 = vsyncpa [#allocation3], 1
    %126 = vsyncpa [#allocation6], 1
    %127 = vsyncpa [#allocation4], 1
    %128 = vsyncpa [#allocation9], 1

</llo_original>
